<compile_context>
chip_gen: v7x
topology: tpu7x:2x2x1
jax: 0.10.0
libtpu: 0.0.40
codegen_flags: <defaults>
</compile_context>

<pallas_src>
import jax
import jax.numpy as jnp
from jax.experimental import pallas as pl
from jax.experimental.pallas import tpu as pltpu

_LANE = 128
_TARGET_BLOCK_BYTES = 6 * 1024 * 1024       # ~6 MiB blocks (fast path)
_RAGGED_BLOCK_BYTES = 256 * 1024            # rare-path blocks (kept small/safe)
_MIN_GRID_STEPS = 8                         # v7x megacore load balance


def _sigmoidal_kernel(x_ref, o_ref):
    # (1 - exp(-x)) / (1 + exp(-x)) == tanh(x / 2): one EUP transcendental,
    # numerically stable for large |x|.
    # NOTE: on a masked partial final block this also computes tanh on
    # undefined padding elements; that is fine because the corresponding
    # stores are masked / discarded by the pipeline.  Do not turn the partial
    # block write into an unmasked full-block write.
    x = x_ref[...].astype(jnp.float32)
    o_ref[...] = jnp.tanh(0.5 * x).astype(o_ref.dtype)


def _compiler_params(block_bytes):
    # Explicit VMEM limit: >= pipelined footprint (4 x block + scratch),
    # <= 48 MiB so it stays under v7x's 64 MiB physical VMEM per TensorCore
    # (and well under v5e/v6e's 128 MiB physical, above their scoped defaults).
    vmem_limit = int(min(48 << 20, max(32 << 20, 6 * block_bytes)))
    return pltpu.CompilerParams(
        dimension_semantics=("parallel",),
        vmem_limit_bytes=vmem_limit,
    )


def _cost(n, itemsize):
    # Pure streaming op: read + write, one transcendental per element.
    return pl.CostEstimate(flops=n, transcendentals=n,
                           bytes_accessed=2 * n * itemsize)


def _block_rows(rows, row_bytes, sublane_mult, target_bytes):
    """Block height: as close to target_bytes as possible, but keep at least
    _MIN_GRID_STEPS grid steps when the input is large enough."""
    tr = max(sublane_mult,
             (target_bytes // row_bytes) // sublane_mult * sublane_mult)
    cap = rows // _MIN_GRID_STEPS // sublane_mult * sublane_mult
    if cap >= sublane_mult:
        tr = min(tr, cap)
    return min(tr, rows)        # tr == rows (full extent) is always legal


def _sigmoidal_2d(x_flat, n, dtype, itemsize, sublane_mult, target_bytes):
    """Fast path: n % 128 == 0 -> zero-copy lane-dense 2-D slab."""
    last = _LANE
    for cand in (2048, 1024, 512, 256):
        if n % cand == 0:
            last = cand
            break
    rows = n // last
    x2d = x_flat.reshape(rows, last)

    tr = _block_rows(rows, last * itemsize, sublane_mult, target_bytes)
    grid = (pl.cdiv(rows, tr),)              # partial final block is masked
    block_bytes = tr * last * itemsize

    out2d = pl.pallas_call(
        _sigmoidal_kernel,
        out_shape=jax.ShapeDtypeStruct((rows, last), dtype),
        grid=grid,
        in_specs=[pl.BlockSpec((tr, last), lambda i: (i, 0))],
        out_specs=pl.BlockSpec((tr, last), lambda i: (i, 0)),
        compiler_params=_compiler_params(block_bytes),
        cost_estimate=_cost(n, itemsize),
    )(x2d)
    return out2d.reshape(-1)


def _sigmoidal_ragged(x_flat, n, dtype, itemsize, sublane_mult):
    """Rare path: n % 128 != 0.  View the data as (1, n) and block along the
    lane dimension with a masked partial final block -> zero pad/slice passes
    over HBM (exactly one read + one write of the data)."""
    blk_mult = sublane_mult * _LANE
    blk = max(blk_mult,
              (_RAGGED_BLOCK_BYTES // itemsize) // blk_mult * blk_mult)
    if blk >= n:
        blk = n                               # full extent: single block
    grid = (pl.cdiv(n, blk),)
    block_bytes = blk * itemsize

    x2d = x_flat.reshape(1, n)
    out2d = pl.pallas_call(
        _sigmoidal_kernel,
        out_shape=jax.ShapeDtypeStruct((1, n), dtype),
        grid=grid,
        in_specs=[pl.BlockSpec((1, blk), lambda i: (0, i))],
        out_specs=pl.BlockSpec((1, blk), lambda i: (0, i)),
        compiler_params=_compiler_params(block_bytes),
        cost_estimate=_cost(n, itemsize),
    )(x2d)
    return out2d.reshape(-1)


def sigmoidal(x, *, target_block_bytes=_TARGET_BLOCK_BYTES):
    """Apply the 'sigmoidal' activation element-wise via a Pallas TPU kernel."""
    # tanh values lie in (-1, 1): casting back to an integer dtype would
    # collapse them to {-1, 0, 1}, so non-float inputs compute & return f32.
    if not jnp.issubdtype(x.dtype, jnp.floating):
        x = x.astype(jnp.float32)

    orig_shape = x.shape
    dtype = x.dtype
    n = x.size
    if n == 0:
        return x

    itemsize = jnp.dtype(dtype).itemsize
    # Minimum sublane multiple per dtype width: f32 -> 8, bf16 -> 16, 8-bit -> 32.
    sublane_mult = {4: 8, 2: 16, 1: 32}.get(itemsize, 8)

    x_flat = x.reshape(-1)
    if n % _LANE == 0:
        out_flat = _sigmoidal_2d(x_flat, n, dtype, itemsize, sublane_mult,
                                 target_block_bytes)
    else:
        out_flat = _sigmoidal_ragged(x_flat, n, dtype, itemsize, sublane_mult)
    return out_flat.reshape(orig_shape)


if __name__ == "__main__":
    key = jax.random.PRNGKey(0)

    def ref(x):
        z = jnp.exp(-x)
        return (1.0 - z) / (1.0 + z)

    # Small NCHW-style input consistent with the module spec.
    x = jax.random.normal(key, (2, 4, 16, 16), dtype=jnp.float32)
    y = sigmoidal(x)
    jax.block_until_ready(y)
    assert y.shape == x.shape and y.dtype == x.dtype
    assert jnp.allclose(y, ref(x), atol=1e-5, rtol=1e-5)

    # Medium input: exercises the multi-step grid + masked partial sublane block.
    k1, k2 = jax.random.split(key)
    x2 = jax.random.normal(k1, (4, 16, 33, 128), dtype=jnp.float32)
    y2 = sigmoidal(x2)
    jax.block_until_ready(y2)
    assert jnp.allclose(y2, ref(x2), atol=1e-5, rtol=1e-5)

    # Ragged element counts (not a multiple of 128): zero-copy masked path.
    x3 = jax.random.normal(k2, (3, 5, 7), dtype=jnp.float32)
    y3 = sigmoidal(x3)
    jax.block_until_ready(y3)
    assert jnp.allclose(y3, ref(x3), atol=1e-5, rtol=1e-5)

    x4 = jax.random.normal(key, (5, 161, 163), dtype=jnp.float32)  # crosses a block
    y4 = sigmoidal(x4)
    jax.block_until_ready(y4)
    assert jnp.allclose(y4, ref(x4), atol=1e-5, rtol=1e-5)

    # Stability check: large-negative inputs must give -1, not NaN.
    y_neg = sigmoidal(jnp.full((8, 128), -200.0, dtype=jnp.float32))
    jax.block_until_ready(y_neg)
    assert jnp.allclose(y_neg, -1.0)

    print("KERNEL_OK")
</pallas_src>

<mosaic_0001>
module attributes {stable_mosaic.version = 11 : i64} {
  func.func @_sigmoidal_kernel(%arg0: i32, %arg1: memref<1x2048xf32, #tpu.memory_space<vmem>>, %arg2: memref<1x2048xf32, #tpu.memory_space<vmem>>) attributes {dimension_semantics = [#tpu.dimension_semantics<parallel>], iteration_bounds = array<i64: 1>, scalar_prefetch = 0 : i64, scratch_operands = 0 : i64, tpu.core_type = #tpu.core_type<tc>, window_params = [{transform_indices = @transform_0, window_bounds = array<i64: 1, 2048>}, {transform_indices = @transform_1, window_bounds = array<i64: 1, 2048>}]} {
    %c0 = arith.constant 0 : index
    %c0_0 = arith.constant 0 : index
    %0 = vector.load %arg1[%c0, %c0_0] : memref<1x2048xf32, #tpu.memory_space<vmem>>, vector<1x2048xf32>
    %cst = arith.constant 5.000000e-01 : f32
    %1 = vector.broadcast %cst : f32 to vector<1x2048xf32>
    %2 = arith.mulf %1, %0 : vector<1x2048xf32>
    %3 = math.tanh %2 : vector<1x2048xf32>
    %c0_1 = arith.constant 0 : index
    %c0_2 = arith.constant 0 : index
    %4 = vector.load %arg2[%c0_1, %c0_2] : memref<1x2048xf32, #tpu.memory_space<vmem>>, vector<1x2048xf32>
    tpu.vector_store %arg2[%c0_1, %c0_2], %3 {strides = array<i32>} : memref<1x2048xf32, #tpu.memory_space<vmem>>, vector<1x2048xf32>,
    return
  }
  func.func @transform_0(%arg0: i32) -> (i32, i32) {
    %c0_i32 = arith.constant 0 : i32
    %c0_i32_0 = arith.constant 0 : i32
    return %arg0, %c0_i32 : i32, i32
  }
  func.func @transform_1(%arg0: i32) -> (i32, i32) {
    %c0_i32 = arith.constant 0 : i32
    %c0_i32_0 = arith.constant 0 : i32
    return %arg0, %c0_i32 : i32, i32
  }
}

</mosaic_0001>

<llo_original>
// kernel: tpu_custom_call.1
$region0: #{tpu_custom_call.1}
  #allocation0 [shape = 'u32[]', space=smem, size = 0x4, offset = 0x4, fixed_abs, tag = 'smem constant byte address 0x4 - core index']
  #allocation1 [shape = 'u32[144,128]{1,0:T(1,128)}', space=vmem, size = 0x12000, scoped, tag = 'internal scratch']
  %s0 = inlined_call_operand.hbm [shape: f32[1,2048], index: 0, kind: input, shape index: {}]
  %s1 = inlined_call_operand.hbm [shape: f32[1,2048], index: 1, kind: output, shape index: {}]
  %s2 = sld [smem:[#allocation0]]
  $region18: #{tpu_custom_call.1} parent=0
    _
  %s4 = ssub.s32 1, %s2
  %s5 = scalar_select 0, %s4, %s2
  $region1: #{tpu_custom_call.1} parent=0
    #allocation2 [shape = 'u8[8192]{0}', space=vmem, size = 0x2000, scoped, tag = 'input window, operand 0, single buffered']
    #allocation3 [shape = 's32[1]{0}', space=sflag, size = 0x4, scoped, tag = 'scoped memory for tpu_custom_call.1']
    #allocation4 [shape = 's32[1]{0}', space=sflag, size = 0x4, scoped, tag = 'scoped memory for tpu_custom_call.1']
    #allocation5 [shape = 'u8[8192]{0}', space=vmem, size = 0x2000, scoped, tag = 'output window, operand 0, single buffered']
    %6 = vsyncpa [#allocation3], 0
    %7 = vsyncpa [#allocation4], 0
    // Predicated region
    $region2: #{tpu_custom_call.1} parent=1 // pred_check
      _
    $region3: #{tpu_custom_call.1} parent=1 // pred_check_branch
      %9 = sbr.rel (0) target = $region5
    $region4: #{tpu_custom_call.1} parent=1 // pred_region
      %s11 = ssub.s32 256, 256
      %12 = vsyncadd [#allocation3], %s11
      %s14 = sshll.u32 [#allocation2], 4
      %s15 = int_to_ptr.vmem [resolvable:$true] %s14
      %17 = dma.hbm_to_vmem [thread:$0]  %s0, 256, %s15, [#allocation3]
    $region5: #{tpu_custom_call.1} parent=1 // pred_fallthru
      _
    // Predicated region
    $region6: #{tpu_custom_call.1} parent=1 // pred_check
      _
    $region7: #{tpu_custom_call.1} parent=1 // pred_check_branch
      %19 = sbr.rel (0) target = $region9
    $region8: #{tpu_custom_call.1} parent=1 // pred_region
      %20 = dma.done [#allocation3], 256
    $region9: #{tpu_custom_call.1} parent=1 // pred_fallthru
      _
    %v21 = vld [vmem:[#allocation2] sm:$0xff]
    %v22 = vld [vmem:[#allocation2 + $0x8] sm:$0xff]
    %v23 = vmul.f32 %v21, 0.5
    %v24 = vmul.f32 %v22, 0.5
    %v25 = vtanh.pop %v23
    %v26 = vtanh.pop %v24
    %27 = vst [vmem:[#allocation5] sm:$0xff] %v25
    %28 = vst [vmem:[#allocation5 + $0x8] sm:$0xff] %v26
    // Predicated region
    $region10: #{tpu_custom_call.1} parent=1 // pred_check
      _
    $region11: #{tpu_custom_call.1} parent=1 // pred_check_branch
      %30 = sbr.rel (0) target = $region13
    $region12: #{tpu_custom_call.1} parent=1 // pred_region
      %s32 = ssub.s32 256, 256
      %33 = vsyncadd [#allocation4], %s32
      %s35 = sshll.u32 [#allocation5], 4
      %s36 = int_to_ptr.vmem [resolvable:$true] %s35
      %38 = dma.vmem_to_hbm [thread:$0]  %s36, 256, %s1, [#allocation4]
    $region13: #{tpu_custom_call.1} parent=1 // pred_fallthru
      _
    // Predicated region
    $region14: #{tpu_custom_call.1} parent=1 // pred_check
      _
    $region15: #{tpu_custom_call.1} parent=1 // pred_check_branch
      %40 = sbr.rel (0) target = $region17
    $region16: #{tpu_custom_call.1} parent=1 // pred_region
      %41 = dma.done [#allocation4], 256
    $region17: #{tpu_custom_call.1} parent=1 // pred_fallthru
      _
    %42 = vsyncpa [#allocation3], 1
    %43 = vsyncpa [#allocation4], 1

</llo_original>
